<compile_context>
chip_gen: v5e
topology: v5e:2x2
jax: 0.10.0
libtpu: 0.0.40
codegen_flags: <defaults>
</compile_context>

<pallas_src>
import functools

import jax
import jax.numpy as jnp
import numpy as np
from jax import lax
from jax.experimental import pallas as pl
from jax.experimental.pallas import tpu as pltpu

C_IN = 3
C_HIDDEN = 8
NUM_ITERATIONS = 3
REFINEMENT_SCALE = 0.5
B_TILE = 8          # images per grid step, laid on the sublane axis


# ----------------------------- roll convention probe -------------------------
@functools.lru_cache(maxsize=None)
def _roll_matches_jnp():
    """One-time probe of pltpu.roll's shift convention (guards the tap signs)."""
    def probe(x_ref, o_ref):
        o_ref[...] = pltpu.roll(x_ref[...], shift=1, axis=1)

    x = jnp.tile(jnp.arange(128, dtype=jnp.float32)[None, :], (8, 1))
    y = pl.pallas_call(
        probe,
        out_shape=jax.ShapeDtypeStruct((8, 128), jnp.float32),
        in_specs=[pl.BlockSpec(memory_space=pltpu.MemorySpace.VMEM)],
        out_specs=pl.BlockSpec(memory_space=pltpu.MemorySpace.VMEM),
    )(x)
    # jnp.roll convention: y[i] = x[i - shift]  =>  y[:, 1] == 0.
    return bool(np.asarray(jax.device_get(y))[0, 1] == 0.0)


# ----------------------------- host-side mask build ---------------------------
def _make_masks(height, width, b_tile):
    """{0,1} f32 masks (8, b_tile, H*W) for the 8 off-center conv taps.

    Built once in the wrapper (not per grid step).  Pre-broadcast over the
    sublane (batch) axis so the in-kernel multiply is a plain elementwise op.
    Row order follows (ky, kx) row-major with the center tap skipped.
    """
    n = height * width
    pos = np.arange(n)
    r = pos // width
    c = pos % width
    rows = []
    for ky in range(3):
        for kx in range(3):
            if ky == 1 and kx == 1:
                continue
            rr = r + (ky - 1)
            cc = c + (kx - 1)
            valid = (rr >= 0) & (rr < height) & (cc >= 0) & (cc < width)
            rows.append(valid.astype(np.float32))
    m = np.stack(rows, axis=0)                                   # (8, n)
    m = np.broadcast_to(m[:, None, :], (8, b_tile, n)).copy()    # (8, Bt, n)
    return jnp.asarray(m)


# ----------------------------- Pallas kernel ---------------------------------
def _conv3x3(xs, w_ref, b_ref, *, masks_ref, cout, width, n, roll_is_jnp):
    """3x3 same-padding conv on per-channel (B_TILE, N) slabs (VPU scalar-FMA).

    xs: list[cin] of (B_TILE, N) f32 values.
    w_ref: flat f32 SMEM ref, layout (cout, cin, 3, 3) row-major.
    b_ref: flat f32 SMEM ref, (cout,).
    Taps are streamed: one shifted+masked slab live at a time.
    Returns list[cout] of (B_TILE, N) f32 values.
    """
    cin = len(xs)
    acc = [None] * cout
    t = 0
    for ky in range(3):
        for kx in range(3):
            s = (ky - 1) * width + (kx - 1)   # tap[p] = x[p + s] (zero-padded)
            if s == 0:
                m = None
            else:
                m = masks_ref[t if t < 4 else t - 1]           # (B_TILE, N)
            amt = ((-s) % n) if roll_is_jnp else (s % n)
            for ci in range(cin):
                if s == 0:
                    tap = xs[ci]
                else:
                    tap = pltpu.roll(xs[ci], shift=amt, axis=1) * m
                for co in range(cout):
                    w = w_ref[(co * cin + ci) * 9 + t]         # SMEM scalar
                    term = w * tap
                    acc[co] = term if acc[co] is None else acc[co] + term
            t += 1
    return [acc[co] + b_ref[co] for co in range(cout)]


def refined_autoencoder_kernel(x_ref, masks_ref,
                               w1_ref, b1_ref, w2_ref, b2_ref,
                               wr1_ref, br1_ref, wr2_ref, br2_ref,
                               out_ref, *,
                               c_in, c_hidden, height, width,
                               num_iterations, refinement_scale, roll_is_jnp):
    n = height * width
    conv = functools.partial(_conv3x3, masks_ref=masks_ref, width=width, n=n,
                             roll_is_jnp=roll_is_jnp)

    # Activations kept as per-channel (B_TILE, N) slabs (batch on sublanes).
    xs = [x_ref[ci].astype(jnp.float32) for ci in range(c_in)]

    # Synthetic base autoencoder: Conv(3->8) ReLU Conv(8->3) Sigmoid.
    h = [jnp.maximum(v, 0.0) for v in conv(xs, w1_ref, b1_ref, cout=c_hidden)]
    x_hat = [jax.nn.sigmoid(v) for v in conv(h, w2_ref, b2_ref, cout=c_in)]

    # Iterative refinement (same weights every iteration, as in the nn.Module).
    for _ in range(num_iterations):
        c1 = [jnp.maximum(v, 0.0)
              for v in conv(x_hat, wr1_ref, br1_ref, cout=c_in)]
        c2 = conv(c1, wr2_ref, br2_ref, cout=c_in)
        x_hat = [x_hat[co] + refinement_scale * c2[co] for co in range(c_in)]

    for co in range(c_in):
        out_ref[co] = x_hat[co].astype(out_ref.dtype)


# ------------------------------- wrapper --------------------------------------
def refined_autoencoder(x, params, *, num_iterations=NUM_ITERATIONS,
                        refinement_scale=REFINEMENT_SCALE, b_tile=B_TILE):
    w1, b1, w2, b2, wr1, br1, wr2, br2 = params
    B, C, H, W = x.shape
    n = H * W
    c_hidden = w1.shape[0]

    # Pad the batch to a multiple of b_tile and lay batch on the sublane axis:
    # (num_tiles, C, b_tile, n) blocks -> last two dims (8, 256) are vreg-dense.
    num_tiles = pl.cdiv(B, b_tile)
    b_pad = num_tiles * b_tile
    x_flat = x.reshape(B, C, n).astype(jnp.float32)
    if b_pad != B:
        x_flat = jnp.concatenate(
            [x_flat, jnp.zeros((b_pad - B, C, n), x_flat.dtype)], axis=0)
    x_blk = x_flat.reshape(num_tiles, b_tile, C, n).transpose(0, 2, 1, 3)

    masks = _make_masks(H, W, b_tile)               # hoisted out of the kernel

    # Flat f32 weight/bias arrays -> SMEM scalars (no padded VMEM columns).
    flat_params = []
    for w, b in ((w1, b1), (w2, b2), (wr1, br1), (wr2, br2)):
        flat_params.append(w.reshape(-1))           # (cout*cin*9,)
        flat_params.append(b.reshape(-1))           # (cout,)

    kernel = functools.partial(
        refined_autoencoder_kernel, c_in=C, c_hidden=c_hidden,
        height=H, width=W, num_iterations=num_iterations,
        refinement_scale=refinement_scale, roll_is_jnp=_roll_matches_jnp())

    smem_spec = pl.BlockSpec(memory_space=pltpu.MemorySpace.SMEM)
    out_blk = pl.pallas_call(
        kernel,
        out_shape=jax.ShapeDtypeStruct((num_tiles, C, b_tile, n), jnp.float32),
        grid=(num_tiles,),
        in_specs=[pl.BlockSpec((None, C, b_tile, n), lambda i: (i, 0, 0, 0)),
                  pl.BlockSpec((8, b_tile, n), lambda i: (0, 0, 0))]
                 + [smem_spec] * len(flat_params),
        out_specs=pl.BlockSpec((None, C, b_tile, n), lambda i: (i, 0, 0, 0)),
        compiler_params=pltpu.CompilerParams(
            dimension_semantics=("parallel",)),
    )(x_blk, masks, *flat_params)

    out = out_blk.transpose(0, 2, 1, 3).reshape(b_pad, C, n)[:B]
    return out.reshape(B, C, H, W)


# --------------------------- parameter setup ----------------------------------
def _init_conv(key, cout, cin, k=3):
    """Deterministic PyTorch-style uniform(-1/sqrt(fan_in), 1/sqrt(fan_in)) init."""
    kw, kb = jax.random.split(key)
    bound = 1.0 / np.sqrt(cin * k * k)
    w = jax.random.uniform(kw, (cout, cin, k, k), jnp.float32, -bound, bound)
    b = jax.random.uniform(kb, (cout,), jnp.float32, -bound, bound)
    return w, b


def make_params(key):
    k1, k2, k3, k4 = jax.random.split(key, 4)
    w1, b1 = _init_conv(k1, C_HIDDEN, C_IN)     # base encoder conv
    w2, b2 = _init_conv(k2, C_IN, C_HIDDEN)     # base decoder conv
    wr1, br1 = _init_conv(k3, C_IN, C_IN)       # refinement conv 1
    wr2, br2 = _init_conv(k4, C_IN, C_IN)       # refinement conv 2
    return (w1, b1, w2, b2, wr1, br1, wr2, br2)


# --------------------------- pure-JAX reference --------------------------------
def _conv_ref(x, w, b):
    y = lax.conv_general_dilated(x, w, window_strides=(1, 1), padding="SAME",
                                 dimension_numbers=("NCHW", "OIHW", "NCHW"),
                                 precision=lax.Precision.HIGHEST)
    return y + b[None, :, None, None]


def reference_forward(x, params):
    w1, b1, w2, b2, wr1, br1, wr2, br2 = params
    h = jnp.maximum(_conv_ref(x, w1, b1), 0.0)
    x_hat = jax.nn.sigmoid(_conv_ref(h, w2, b2))
    for _ in range(NUM_ITERATIONS):
        c = _conv_ref(jnp.maximum(_conv_ref(x_hat, wr1, br1), 0.0), wr2, br2)
        x_hat = x_hat + REFINEMENT_SCALE * c
    return x_hat


# ------------------------------------ main -------------------------------------
if __name__ == "__main__":
    key = jax.random.PRNGKey(0)
    kx, kp = jax.random.split(key)

    # 16 images -> 2 batch tiles of 8 -> 2 parallel grid steps (both v7x TCs).
    x = jax.random.normal(kx, (16, C_IN, 16, 16), dtype=jnp.float32)
    params = make_params(kp)

    out = jax.block_until_ready(refined_autoencoder(x, params))
    ref = jax.block_until_ready(reference_forward(x, params))
    np.testing.assert_allclose(np.asarray(out), np.asarray(ref),
                               rtol=2e-4, atol=2e-4)
    print("KERNEL_OK")
</pallas_src>

<mosaic_0001>
module attributes {stable_mosaic.version = 11 : i64} {
  func.func @probe(%arg0: memref<8x128xf32, #tpu.memory_space<vmem>>, %arg1: memref<8x128xf32, #tpu.memory_space<vmem>>) attributes {dimension_semantics = [], scalar_prefetch = 0 : i64, scratch_operands = 0 : i64, tpu.core_type = #tpu.core_type<tc>} {
    %c0 = arith.constant 0 : index
    %c0_0 = arith.constant 0 : index
    %0 = vector.load %arg0[%c0, %c0_0] : memref<8x128xf32, #tpu.memory_space<vmem>>, vector<8x128xf32>
    %c1_i32 = arith.constant 1 : i32
    %1 = tpu.dynamic_rotate %0 by %c1_i32 dim 1 : vector<8x128xf32>, i32 -> vector<8x128xf32>
    %c0_1 = arith.constant 0 : index
    %c0_2 = arith.constant 0 : index
    %2 = vector.load %arg1[%c0_1, %c0_2] : memref<8x128xf32, #tpu.memory_space<vmem>>, vector<8x128xf32>
    tpu.vector_store %arg1[%c0_1, %c0_2], %1 {strides = array<i32>} : memref<8x128xf32, #tpu.memory_space<vmem>>, vector<8x128xf32>,
    return
  }
}

</mosaic_0001>

<llo_original>
// kernel: tpu_custom_call.1
$region0: #{tpu_custom_call.1}
  #allocation0 [shape = 'u32[]', space=smem, size = 0x4, offset = 0x4, fixed_abs, tag = 'smem constant byte address 0x4 - core index']
  #allocation1 [shape = 'u32[72,128]{1,0:T(1,128)}', space=vmem, size = 0x9000, scoped, tag = 'internal scratch']
  %s0 = inlined_call_operand.hbm [shape: f32[8,128], index: 0, kind: input, shape index: {}]
  %s1 = inlined_call_operand.hbm [shape: f32[8,128], index: 1, kind: output, shape index: {}]
  %s2 = sld [smem:[#allocation0]]
  $region18: #{tpu_custom_call.1} parent=0
    _
  %s4 = ssub.s32 1, %s2
  %s5 = scalar_select 0, %s4, %s2
  $region1: #{tpu_custom_call.1} parent=0
    #allocation2 [shape = 'u8[4096]{0}', space=vmem, size = 0x1000, scoped, tag = 'input window, operand 0, single buffered']
    #allocation3 [shape = 's32[1]{0}', space=sflag, size = 0x4, scoped, tag = 'scoped memory for tpu_custom_call.1']
    #allocation4 [shape = 's32[1]{0}', space=sflag, size = 0x4, scoped, tag = 'scoped memory for tpu_custom_call.1']
    #allocation5 [shape = 'u8[4096]{0}', space=vmem, size = 0x1000, scoped, tag = 'output window, operand 0, single buffered']
    %6 = vsyncpa [#allocation3], 0
    %7 = vsyncpa [#allocation4], 0
    // Predicated region
    $region2: #{tpu_custom_call.1} parent=1 // pred_check
      _
    $region3: #{tpu_custom_call.1} parent=1 // pred_check_branch
      %9 = sbr.rel (0) target = $region5
    $region4: #{tpu_custom_call.1} parent=1 // pred_region
      %11 = vsyncadd [#allocation3], 0
      %s13 = sshll.u32 %s0, 4
      %s14 = int_to_ptr.hbm [resolvable:$true] %s13
      %s15 = sshll.u32 [#allocation2], 4
      %s16 = int_to_ptr.vmem [resolvable:$true] %s15
      %18 = dma.hbm_to_vmem [thread:$0]  %s14, 128, %s16, [#allocation3]
    $region5: #{tpu_custom_call.1} parent=1 // pred_fallthru
      _
    // Predicated region
    $region6: #{tpu_custom_call.1} parent=1 // pred_check
      _
    $region7: #{tpu_custom_call.1} parent=1 // pred_check_branch
      %20 = sbr.rel (0) target = $region9
    $region8: #{tpu_custom_call.1} parent=1 // pred_region
      %22 = dma.done [#allocation3], 128
    $region9: #{tpu_custom_call.1} parent=1 // pred_fallthru
      _
    %v23 = vld [vmem:[#allocation2] sm:$0xff]
    %24 = vrot.lane.b32.xlu0 %v23, 1
    %v25 = vpop.permute.xlu0 %24
    %26 = vst [vmem:[#allocation5] sm:$0xff] %v25
    // Predicated region
    $region10: #{tpu_custom_call.1} parent=1 // pred_check
      _
    $region11: #{tpu_custom_call.1} parent=1 // pred_check_branch
      %28 = sbr.rel (0) target = $region13
    $region12: #{tpu_custom_call.1} parent=1 // pred_region
      %30 = vsyncadd [#allocation4], 0
      %s32 = sshll.u32 [#allocation5], 4
      %s33 = int_to_ptr.vmem [resolvable:$true] %s32
      %s34 = sshll.u32 %s1, 4
      %s35 = int_to_ptr.hbm [resolvable:$true] %s34
      %37 = dma.vmem_to_hbm [thread:$0]  %s33, 128, %s35, [#allocation4]
    $region13: #{tpu_custom_call.1} parent=1 // pred_fallthru
      _
    // Predicated region
    $region14: #{tpu_custom_call.1} parent=1 // pred_check
      _
    $region15: #{tpu_custom_call.1} parent=1 // pred_check_branch
      %39 = sbr.rel (0) target = $region17
    $region16: #{tpu_custom_call.1} parent=1 // pred_region
      %41 = dma.done [#allocation4], 128
    $region17: #{tpu_custom_call.1} parent=1 // pred_fallthru
      _
    %42 = vsyncpa [#allocation3], 1
    %43 = vsyncpa [#allocation4], 1

</llo_original>
